<compile_context>
chip_gen: v7x
topology: tpu7x:2x2x1
jax: 0.10.0
libtpu: 0.0.40
codegen_flags: <defaults>
</compile_context>

<pallas_src>
import functools
import math

import jax
import jax.numpy as jnp
from jax import lax
from jax.experimental import pallas as pl
from jax.experimental.pallas import tpu as pltpu


_TILE_TARGET_BYTES = 4 * 1024 * 1024      # ~4 MiB streaming tiles (perf review)
_SMALL_INPUT_MAX_BYTES = 4 * 1024 * 1024  # VMEM-resident single-pass threshold
_VMEM_LIMIT_BYTES = 32 * 1024 * 1024      # safe on v5e / v6e / v7x
# TODO(synk): query pltpu.get_tpu_info() to raise the small-path threshold per
# generation (~48 MiB on v7x, ~100 MiB on v5e/v6e).


# --------------------------------------------------------------------------- #
# Kernels
# --------------------------------------------------------------------------- #
def _small_layer_norm_kernel(x_ref, w_ref, b_ref, o_ref, *, eps, n_valid,
                             pad_count):
    """Whole-array VMEM-resident LayerNorm: 2N HBM traffic, centered variance."""
    x = x_ref[...].astype(jnp.float32)
    mean = jnp.sum(x) / n_valid                 # zero padding contributes 0
    centered = x - mean
    # Each padded zero contributes (0 - mean)^2 = mean^2; subtract them exactly.
    ssq = jnp.sum(centered * centered) - pad_count * mean * mean
    var = ssq / (n_valid - 1.0)                 # unbiased, matches torch.var
    inv_std = lax.rsqrt(var + eps)              # single EUP op
    scale = w_ref[...].astype(jnp.float32) * inv_std        # (1, L)
    shift = b_ref[...].astype(jnp.float32) - mean * scale   # (1, L)
    o_ref[...] = (x * scale + shift).astype(o_ref.dtype)


def _stats_kernel(x_ref, psum_ref, psumsq_ref, *, last_valid_rows, needs_mask):
    """Per-tile (8, L) f32 vector partial sum / sum-of-squares (VPU adds only)."""

    def _accum(x):
        g = x.shape[0] // 8
        # (tile_rows, L) -> (g, 8, L) is layout-preserving (whole vreg rows);
        # the axis-0 reduce is plain vreg-wise VPU adds.
        xr = x.reshape(g, 8, x.shape[1])
        psum_ref[...] = jnp.sum(xr, axis=0)
        psumsq_ref[...] = jnp.sum(xr * xr, axis=0)

    if needs_mask:
        t = pl.program_id(0)
        nt = pl.num_programs(0)

        @pl.when(t == nt - 1)
        def _():
            # Only the last (partial) tile pays for the mask.
            x = x_ref[...].astype(jnp.float32)
            row_ids = lax.broadcasted_iota(jnp.int32, x.shape, 0)
            _accum(jnp.where(row_ids < last_valid_rows, x, 0.0))

        @pl.when(t != nt - 1)
        def _():
            _accum(x_ref[...].astype(jnp.float32))
    else:
        _accum(x_ref[...].astype(jnp.float32))


def _normalize_kernel(x_ref, scale_ref, shift_ref, o_ref):
    """o = x * scale + shift with the affine already folded in (2 VPU ops/elem)."""
    x = x_ref[...].astype(jnp.float32)
    o_ref[...] = (x * scale_ref[...] + shift_ref[...]).astype(o_ref.dtype)


# --------------------------------------------------------------------------- #
# Wrapper helpers
# --------------------------------------------------------------------------- #
def _choose_fold(size, rows):
    """Pack `fold` rows into the lane axis so the last dim is a multiple of 128."""
    if size % 128 == 0:
        return 1
    k = 128 // math.gcd(size, 128)
    if rows % k == 0 or rows >= 8 * k:   # pad overhead <= ~12.5% when rows >= 8k
        return k
    # TODO(synk): lane-pad the feature dim (with zeroed weight/bias) so tiny row
    # counts with size % 128 != 0 also avoid sub-128 masked stores.
    return 1


def _choose_tile_rows(rows_folded, lane_width, itemsize, max_tile_rows=None):
    cap = max(8, _TILE_TARGET_BYTES // max(1, lane_width * itemsize))
    cap = max(8, (cap // 8) * 8)                 # sublane-aligned tiles
    if max_tile_rows is not None:
        cap = min(cap, max(8, (max_tile_rows // 8) * 8))
    if rows_folded <= cap:
        return rows_folded                       # single full-extent tile is legal
    return cap


def _layer_norm_small(x2, w2, b2, eps, n_valid, pad_count):
    kernel = functools.partial(
        _small_layer_norm_kernel, eps=float(eps), n_valid=float(n_valid),
        pad_count=float(pad_count))
    cost = pl.CostEstimate(
        flops=int(6 * x2.size), transcendentals=1,
        bytes_accessed=int(2 * x2.size * x2.dtype.itemsize))
    return pl.pallas_call(
        kernel,
        out_shape=jax.ShapeDtypeStruct(x2.shape, x2.dtype),
        compiler_params=pltpu.CompilerParams(vmem_limit_bytes=_VMEM_LIMIT_BYTES),
        cost_estimate=cost,
    )(x2, w2, b2)


def _layer_norm_streaming(x2, w2, b2, eps, n_valid, max_tile_rows=None):
    rows_folded, lane_width = x2.shape
    itemsize = x2.dtype.itemsize
    tile_rows = _choose_tile_rows(rows_folded, lane_width, itemsize, max_tile_rows)
    num_tiles = pl.cdiv(rows_folded, tile_rows)
    last_valid_rows = rows_folded - (num_tiles - 1) * tile_rows
    needs_mask = last_valid_rows != tile_rows

    # ---- pass A: per-tile vector partial statistics (megacore-parallel) ---- #
    stats_kernel = functools.partial(
        _stats_kernel, last_valid_rows=last_valid_rows, needs_mask=needs_mask)
    stats_cost = pl.CostEstimate(
        flops=int(2 * rows_folded * lane_width), transcendentals=0,
        bytes_accessed=int(rows_folded * lane_width * itemsize
                           + 2 * num_tiles * 8 * lane_width * 4))
    psum, psumsq = pl.pallas_call(
        stats_kernel,
        out_shape=(jax.ShapeDtypeStruct((num_tiles * 8, lane_width), jnp.float32),
                   jax.ShapeDtypeStruct((num_tiles * 8, lane_width), jnp.float32)),
        grid=(num_tiles,),
        in_specs=[pl.BlockSpec((tile_rows, lane_width), lambda t: (t, 0))],
        out_specs=(pl.BlockSpec((8, lane_width), lambda t: (t, 0)),
                   pl.BlockSpec((8, lane_width), lambda t: (t, 0))),
        compiler_params=pltpu.CompilerParams(
            dimension_semantics=("parallel",),        # both TCs on v7x megacore
            vmem_limit_bytes=_VMEM_LIMIT_BYTES),
        cost_estimate=stats_cost,
    )(x2)

    # ---- tiny wrapper-side combine: mean / var / fused affine ---- #
    total = jnp.sum(psum, dtype=jnp.float32)
    totalsq = jnp.sum(psumsq, dtype=jnp.float32)
    mean = total / n_valid
    # E[x^2] - mean^2 form (zero padding contributes nothing to either sum).
    # TODO(synk): Chan-style per-tile combine would remove the cancellation risk
    # for |mean| >> std at very large N.
    var = (totalsq - total * mean) / (n_valid - 1.0)
    inv_std = lax.rsqrt(var + eps)
    scale = (w2 * inv_std).astype(jnp.float32)            # (1, L)
    shift = (b2 - mean * scale).astype(jnp.float32)       # (1, L)

    # ---- pass B: fully parallel normalize ---- #
    norm_cost = pl.CostEstimate(
        flops=int(2 * rows_folded * lane_width), transcendentals=0,
        bytes_accessed=int(2 * rows_folded * lane_width * itemsize))
    out2 = pl.pallas_call(
        _normalize_kernel,
        out_shape=jax.ShapeDtypeStruct(x2.shape, x2.dtype),
        grid=(num_tiles,),
        in_specs=[pl.BlockSpec((tile_rows, lane_width), lambda t: (t, 0)),
                  pl.BlockSpec((1, lane_width), lambda t: (0, 0)),
                  pl.BlockSpec((1, lane_width), lambda t: (0, 0))],
        out_specs=pl.BlockSpec((tile_rows, lane_width), lambda t: (t, 0)),
        compiler_params=pltpu.CompilerParams(
            dimension_semantics=("parallel",),
            vmem_limit_bytes=_VMEM_LIMIT_BYTES),
        cost_estimate=norm_cost,
    )(x2, scale, shift)
    return out2


# --------------------------------------------------------------------------- #
# Public entry point
# --------------------------------------------------------------------------- #
def layer_norm(x, weight, bias, eps=1e-12, max_tile_rows=None,
               small_path_max_bytes=_SMALL_INPUT_MAX_BYTES):
    """Global-stats LayerNorm matching the reference PyTorch module."""
    size = weight.shape[0]
    assert x.shape[-1] == size, "last dim of x must equal `size`"
    orig_shape = x.shape
    n_valid = x.size                                  # NOTE: n_valid == 1 -> NaN, like torch.var
    rows = n_valid // size

    fold = _choose_fold(size, rows)
    lane_width = size * fold
    rows_folded = -(-rows // fold)                    # ceil

    in_bytes = rows_folded * lane_width * x.dtype.itemsize
    use_small = in_bytes <= small_path_max_bytes
    if not use_small:
        rows_folded = -(-rows_folded // 8) * 8        # sublane-align streaming tiles

    n_padded = rows_folded * lane_width
    pad_count = n_padded - n_valid

    x_flat = x.reshape(-1)
    if pad_count:
        # Zeros are exactly compensated in the statistics; only a tiny copy in
        # practice (<= fold*8 rows). TODO(synk): in-kernel flat-index masking
        # would avoid this copy for misaligned very large inputs.
        x_flat = jnp.pad(x_flat, (0, pad_count))
    x2 = x_flat.reshape(rows_folded, lane_width)
    w2 = jnp.tile(weight, (fold,)).reshape(1, lane_width).astype(jnp.float32)
    b2 = jnp.tile(bias, (fold,)).reshape(1, lane_width).astype(jnp.float32)

    if use_small:
        out2 = _layer_norm_small(x2, w2, b2, eps, n_valid, pad_count)
    else:
        out2 = _layer_norm_streaming(x2, w2, b2, eps, n_valid, max_tile_rows)

    return out2.reshape(-1)[:n_valid].reshape(orig_shape)


# --------------------------------------------------------------------------- #
# Reference + self-test
# --------------------------------------------------------------------------- #
def _reference(x, weight, bias, eps):
    mean = jnp.mean(x)
    var = jnp.sum((x - mean) ** 2) / (x.size - 1)     # unbiased, like torch.var
    return (x - mean) / jnp.sqrt(var + eps) * weight + bias


if __name__ == "__main__":
    size = 32                           # feature dim ("size" in the module __init__)
    k0, k1, k2, k3, k4 = jax.random.split(jax.random.PRNGKey(0), 5)

    # 1) Module-style params, small input -> VMEM-resident single-pass path.
    weight = jnp.ones((size,), dtype=jnp.float32)
    bias = jnp.zeros((size,), dtype=jnp.float32)
    x = jax.random.normal(k0, (2, 4, size), dtype=jnp.float32)
    out = jax.block_until_ready(layer_norm(x, weight, bias, eps=1e-12))
    ref = _reference(x, weight, bias, 1e-12)
    assert jnp.allclose(out, ref, atol=1e-5, rtol=1e-5), "mismatch (small path)"

    # 2) Forced streaming path: 2 tiles, masked last tile, random affine.
    x_big = jax.random.normal(k1, (6, 16, size), dtype=jnp.float32)
    w_big = jax.random.normal(k2, (size,), dtype=jnp.float32)
    b_big = jax.random.normal(k3, (size,), dtype=jnp.float32)
    out_big = layer_norm(x_big, w_big, b_big, eps=1e-12,
                         max_tile_rows=16, small_path_max_bytes=0)
    out_big = jax.block_until_ready(out_big)
    ref_big = _reference(x_big, w_big, b_big, 1e-12)
    assert jnp.allclose(out_big, ref_big, atol=1e-5, rtol=1e-5), "mismatch (streaming)"

    # 3) Lane-fold with row padding (rows=34 not a multiple of fold=4).
    x_pad = jax.random.normal(k4, (2, 17, size), dtype=jnp.float32)
    out_pad = jax.block_until_ready(layer_norm(x_pad, w_big, b_big, eps=1e-12))
    ref_pad = _reference(x_pad, w_big, b_big, 1e-12)
    assert jnp.allclose(out_pad, ref_pad, atol=1e-5, rtol=1e-5), "mismatch (padded)"

    print("KERNEL_OK")
</pallas_src>

<mosaic_0001>
module attributes {stable_mosaic.version = 11 : i64} {
  func.func @_small_layer_norm_kernel(%arg0: memref<2x128xf32, #tpu.memory_space<vmem>>, %arg1: memref<1x128xf32, #tpu.memory_space<vmem>>, %arg2: memref<1x128xf32, #tpu.memory_space<vmem>>, %arg3: memref<2x128xf32, #tpu.memory_space<vmem>>) attributes {dimension_semantics = [], scalar_prefetch = 0 : i64, scratch_operands = 0 : i64, tpu.core_type = #tpu.core_type<tc>} {
    %c0 = arith.constant 0 : index
    %c0_0 = arith.constant 0 : index
    %0 = vector.load %arg0[%c0, %c0_0] : memref<2x128xf32, #tpu.memory_space<vmem>>, vector<2x128xf32>
    %1 = vector.shape_cast %0 : vector<2x128xf32> to vector<1x2x128xf32>
    %cst = arith.constant dense<0.000000e+00> : vector<1xf32>
    %2 = vector.multi_reduction <add>, %1, %cst [1, 2] : vector<1x2x128xf32> to vector<1xf32>
    %3 = vector.shape_cast %2 : vector<1xf32> to vector<1x1x1xf32>
    %4 = vector.extract %3[0, 0, 0] : f32 from vector<1x1x1xf32>
    %cst_1 = arith.constant 2.560000e+02 : f32
    %5 = arith.divf %4, %cst_1 : f32
    %6 = vector.broadcast %5 : f32 to vector<2x128xf32>
    %7 = arith.subf %0, %6 : vector<2x128xf32>
    %8 = arith.mulf %7, %7 : vector<2x128xf32>
    %9 = vector.shape_cast %8 : vector<2x128xf32> to vector<1x2x128xf32>
    %cst_2 = arith.constant dense<0.000000e+00> : vector<1xf32>
    %10 = vector.multi_reduction <add>, %9, %cst_2 [1, 2] : vector<1x2x128xf32> to vector<1xf32>
    %11 = vector.shape_cast %10 : vector<1xf32> to vector<1x1x1xf32>
    %12 = vector.extract %11[0, 0, 0] : f32 from vector<1x1x1xf32>
    %cst_3 = arith.constant 0.000000e+00 : f32
    %13 = arith.mulf %cst_3, %5 : f32
    %14 = arith.mulf %13, %5 : f32
    %15 = arith.subf %12, %14 : f32
    %cst_4 = arith.constant 2.550000e+02 : f32
    %16 = arith.divf %15, %cst_4 : f32
    %cst_5 = arith.constant 9.99999996E-13 : f32
    %17 = arith.addf %16, %cst_5 : f32
    %18 = math.rsqrt %17 : f32
    %c0_6 = arith.constant 0 : index
    %c0_7 = arith.constant 0 : index
    %19 = vector.load %arg1[%c0_6, %c0_7] : memref<1x128xf32, #tpu.memory_space<vmem>>, vector<1x128xf32>
    %20 = vector.broadcast %18 : f32 to vector<1x128xf32>
    %21 = arith.mulf %19, %20 : vector<1x128xf32>
    %c0_8 = arith.constant 0 : index
    %c0_9 = arith.constant 0 : index
    %22 = vector.load %arg2[%c0_8, %c0_9] : memref<1x128xf32, #tpu.memory_space<vmem>>, vector<1x128xf32>
    %23 = vector.broadcast %5 : f32 to vector<1x128xf32>
    %24 = arith.mulf %23, %21 : vector<1x128xf32>
    %25 = arith.subf %22, %24 : vector<1x128xf32>
    %26 = vector.broadcast %21 : vector<1x128xf32> to vector<2x128xf32>
    %27 = arith.mulf %0, %26 : vector<2x128xf32>
    %28 = vector.broadcast %25 : vector<1x128xf32> to vector<2x128xf32>
    %29 = arith.addf %27, %28 : vector<2x128xf32>
    %c0_10 = arith.constant 0 : index
    %c0_11 = arith.constant 0 : index
    %30 = vector.load %arg3[%c0_10, %c0_11] : memref<2x128xf32, #tpu.memory_space<vmem>>, vector<2x128xf32>
    tpu.vector_store %arg3[%c0_10, %c0_11], %29 {strides = array<i32>} : memref<2x128xf32, #tpu.memory_space<vmem>>, vector<2x128xf32>,
    return
  }
}

</mosaic_0001>

<llo_original>
// kernel: tpu_custom_call.1
$region0: #{tpu_custom_call.1}
  #allocation0 [shape = 'u32[]', space=smem, size = 0x4, offset = 0x4, fixed_abs, tag = 'smem constant byte address 0x4 - core index']
  #allocation1 [shape = 'u32[144,128]{1,0:T(1,128)}', space=vmem, size = 0x12000, scoped, tag = 'internal scratch']
  %s0 = inlined_call_operand.hbm [shape: f32[2,128], index: 0, kind: input, shape index: {}]
  %s1 = inlined_call_operand.vmem [shape: f32[1,128], index: 1, kind: input, shape index: {}]
  %s2 = inlined_call_operand.vmem [shape: f32[1,128], index: 2, kind: input, shape index: {}]
  %s3 = inlined_call_operand.hbm [shape: f32[2,128], index: 3, kind: output, shape index: {}]
  %s4 = sld [smem:[#allocation0]]
  $region26: #{tpu_custom_call.1} parent=0
    _
  %s6 = ssub.s32 1, %s4
  %s7 = scalar_select 0, %s6, %s4
  $region1: #{tpu_custom_call.1} parent=0
    #allocation2 [shape = 'u8[1024]{0}', space=vmem, size = 0x400, scoped, tag = 'input window, operand 0, single buffered']
    #allocation3 [shape = 's32[1]{0}', space=sflag, size = 0x4, scoped, tag = 'scoped memory for tpu_custom_call.1']
    #allocation4 [shape = 's32[1]{0}', space=sflag, size = 0x4, scoped, tag = 'scoped memory for tpu_custom_call.1']
    #allocation5 [shape = 'u8[1024]{0}', space=vmem, size = 0x400, scoped, tag = 'output window, operand 0, single buffered']
    %8 = vsyncpa [#allocation3], 0
    %9 = vsyncpa [#allocation4], 0
    // Predicated region
    $region2: #{tpu_custom_call.1} parent=1 // pred_check
      _
    $region3: #{tpu_custom_call.1} parent=1 // pred_check_branch
      %11 = sbr.rel (0) target = $region5
    $region4: #{tpu_custom_call.1} parent=1 // pred_region
      %s13 = ssub.s32 32, 32
      %14 = vsyncadd [#allocation3], %s13
      %s16 = sshll.u32 [#allocation2], 4
      %s17 = int_to_ptr.vmem [resolvable:$true] %s16
      %19 = dma.hbm_to_vmem [thread:$0]  %s0, 32, %s17, [#allocation3]
    $region5: #{tpu_custom_call.1} parent=1 // pred_fallthru
      _
    // Predicated region
    $region6: #{tpu_custom_call.1} parent=1 // pred_check
      _
    $region7: #{tpu_custom_call.1} parent=1 // pred_check_branch
      %21 = sbr.rel (0) target = $region9
    $region8: #{tpu_custom_call.1} parent=1 // pred_region
      _
    $region9: #{tpu_custom_call.1} parent=1 // pred_fallthru
      _
    // Predicated region
    $region10: #{tpu_custom_call.1} parent=1 // pred_check
      _
    $region11: #{tpu_custom_call.1} parent=1 // pred_check_branch
      %23 = sbr.rel (0) target = $region13
    $region12: #{tpu_custom_call.1} parent=1 // pred_region
      _
    $region13: #{tpu_custom_call.1} parent=1 // pred_fallthru
      _
    // Predicated region
    $region14: #{tpu_custom_call.1} parent=1 // pred_check
      _
    $region15: #{tpu_custom_call.1} parent=1 // pred_check_branch
      %25 = sbr.rel (0) target = $region17
    $region16: #{tpu_custom_call.1} parent=1 // pred_region
      %26 = dma.done [#allocation3], 32
    $region17: #{tpu_custom_call.1} parent=1 // pred_fallthru
      _
    %v27 = vld [vmem:[#allocation2] sm:$0x3]
    %vm28 = vcmask 1041408
    %v29 = vsel %vm28, %v27, 0.0
    %30 = vadd.xlane.f32.xlu0 %v29
    %v31 = vpop.xlane.xlu0 %30
    %v32 = vrot.slane %v31, 4
    %v33 = vadd.f32 %v31, %v32
    %v34 = vrot.slane %v33, 2
    %v35 = vadd.f32 %v33, %v34
    %v36 = vrot.slane %v35, 1
    %v37 = vadd.f32 %v35, %v36
    %s38 = vtos %v37
    %v39 = vrcp.pop 256.0
    %s40 = vtos %v39
    %s41 = smul.f32 %s38, %s40
    %v42 = vstv %s41
    %v43 = vsub.f32 %v27, %v42
    %v44 = vmul.f32 %v43, %v43
    %v45 = vsel %vm28, %v44, 0.0
    %46 = vadd.xlane.f32.xlu0 %v45
    %v47 = vpop.xlane.xlu0 %46
    %v48 = vrot.slane %v47, 4
    %v49 = vadd.f32 %v47, %v48
    %v50 = vrot.slane %v49, 2
    %v51 = vadd.f32 %v49, %v50
    %v52 = vrot.slane %v51, 1
    %v53 = vadd.f32 %v51, %v52
    %s54 = vtos %v53
    %s55 = smul.f32 %s41, 0.0
    %s56 = smul.f32 %s55, %s41
    %s57 = ssub.f32 %s54, %s56
    %v58 = vrcp.pop 255.0
    %s59 = vtos %v58
    %s60 = smul.f32 %s57, %s59
    %s61 = sadd.f32 %s60, 1e-12
    %v62 = vstv %s61
    %v63 = vrsqrt.pop %v62
    %s64 = vtos %v63
    %v65 = vld [vmem:[%s1] sm:$0x1]
    %v66 = vstv %s64
    %v67 = vmul.f32 %v65, %v66
    %v68 = vld [vmem:[%s2] sm:$0x1]
    %v69 = vmul.f32 %v42, %v67
    %v70 = vsub.f32 %v68, %v69
    %v72 = vlaneseq
    %v73 = vshrl.u32 %v72, 7
    %v74 = vsub.s32 0, %v73
    %v75 = vrot.slane %v67, %v74
    %v77 = vmul.f32 %v27, %v75
    %v79 = vlaneseq
    %v80 = vshrl.u32 %v79, 7
    %v81 = vsub.s32 0, %v80
    %v82 = vrot.slane %v70, %v81
    %v84 = vadd.f32 %v77, %v82
    %85 = vst [vmem:[#allocation5] sm:$0x3] %v84
    // Predicated region
    $region18: #{tpu_custom_call.1} parent=1 // pred_check
      _
    $region19: #{tpu_custom_call.1} parent=1 // pred_check_branch
      %87 = sbr.rel (0) target = $region21
    $region20: #{tpu_custom_call.1} parent=1 // pred_region
      %s89 = ssub.s32 32, 32
      %90 = vsyncadd [#allocation4], %s89
      %s92 = sshll.u32 [#allocation5], 4
      %s93 = int_to_ptr.vmem [resolvable:$true] %s92
      %95 = dma.vmem_to_hbm [thread:$0]  %s93, 32, %s3, [#allocation4]
    $region21: #{tpu_custom_call.1} parent=1 // pred_fallthru
      _
    // Predicated region
    $region22: #{tpu_custom_call.1} parent=1 // pred_check
      _
    $region23: #{tpu_custom_call.1} parent=1 // pred_check_branch
      %97 = sbr.rel (0) target = $region25
    $region24: #{tpu_custom_call.1} parent=1 // pred_region
      %98 = dma.done [#allocation4], 32
    $region25: #{tpu_custom_call.1} parent=1 // pred_fallthru
      _
    %99 = vsyncpa [#allocation3], 1
    %100 = vsyncpa [#allocation4], 1

</llo_original>
